<compile_context>
chip_gen: v6e
topology: v6e:2x2x1
jax: 0.10.0
libtpu: 0.0.40
codegen_flags: <defaults>
</compile_context>

<pallas_src>
import numpy as np
import jax
import jax.numpy as jnp
from jax.experimental import pallas as pl
from jax.experimental.pallas import tpu as pltpu


def _identity_copy_kernel(x_ref, o_ref):
    o_ref[...] = x_ref[...]


def _default_target_tile_bytes():
    """Generation-aware VMEM tile budget for the copy kernel.

    v5e: 16 MiB scoped-VMEM default, pipeline footprint = 4x tile -> 2 MiB.
    v6e/v7x: 32 MiB scoped default -> 4 MiB tiles (16 MiB footprint, well
    under v7x's 64 MiB physical VMEM).
    """
    try:
        kind = jax.devices()[0].device_kind.lower()
    except Exception:
        kind = ""
    if "v5" in kind:
        return 2 * 1024 * 1024
    return 4 * 1024 * 1024


def _vmem_identity_copy(x, *, target_tile_bytes=None):
    """Explicit identity copy through VMEM (only used when forced).

    Flattens to a lane-dense (rows, 128) slab (padding up to the dtype's
    native (sublane x 128) tile if necessary) and copies it with row tiling.
    Works for any shape/dtype; large non-aligned shapes stay tiled instead of
    requiring a whole-array VMEM block.
    """
    n = x.size
    if n == 0:
        return x
    orig_shape = x.shape

    itemsize = jnp.dtype(x.dtype).itemsize
    # Native sublane tile: 8 rows for 32-bit, 16 for 16-bit, 32 for 8-bit.
    sublane = max(8, 32 // max(1, itemsize))
    chunk = sublane * 128

    flat = x.reshape(-1)
    padded_n = ((n + chunk - 1) // chunk) * chunk
    if padded_n != n:
        flat = jnp.pad(flat, (0, padded_n - n))
    rows = padded_n // 128
    x2 = flat.reshape(rows, 128)

    # Row block: as big as the per-generation tile budget allows, aligned to
    # the native sublane tile, never larger than the array itself.
    if target_tile_bytes is None:
        target_tile_bytes = _default_target_tile_bytes()
    rows_per_tile = (target_tile_bytes // (128 * itemsize)) // sublane * sublane
    tb = int(min(rows, max(sublane, rows_per_tile)))

    out = pl.pallas_call(
        _identity_copy_kernel,
        out_shape=jax.ShapeDtypeStruct((rows, 128), x.dtype),
        grid=(pl.cdiv(rows, tb),),
        in_specs=[pl.BlockSpec((tb, 128), lambda i: (i, 0))],
        out_specs=pl.BlockSpec((tb, 128), lambda i: (i, 0)),
        compiler_params=pltpu.CompilerParams(
            # No-op on single-TC v5e/v6e; lets both v7x TCs issue DMAs.
            dimension_semantics=("parallel",)),
        # Pure memory traffic: 2 * n bytes (read + write), zero flops.
        cost_estimate=pl.CostEstimate(
            flops=0, transcendentals=0, bytes_accessed=2 * n * itemsize),
    )(x2)

    out_flat = out.reshape(-1)
    if padded_n != n:
        out_flat = out_flat[:n]
    return out_flat.reshape(orig_shape)


def tokenizer_layer_forward(inputs, *, padlen=16, batch_first=True,
                            nthreads=1, destchar="i",
                            force_vmem_copy=False):
    """JAX equivalent of TokenizerLayer.forward.

    Tensor inputs are returned unchanged (identity), exactly like the PyTorch
    module -- no kernel launch, no HBM round trip.  Set force_vmem_copy=True
    to route the tokens through an explicit lane-dense, tiled VMEM copy.
    `padlen` / `batch_first` / `nthreads` / `destchar` are accepted for API
    parity; like the PyTorch layer, the tensor fast-path does not use them.
    """
    if not isinstance(inputs, (jnp.ndarray, jax.Array)):
        # TODO(synk): tokenizer.batch_tokenize on list[str] is host-side string
        # processing with no Pallas/TPU equivalent.
        raise NotImplementedError(
            "Non-tensor inputs (string tokenization) cannot run on TPU."
        )

    if force_vmem_copy:
        return _vmem_identity_copy(inputs)
    # Fast path: identity, zero overhead (matches `return inputs` in PyTorch).
    return inputs


if __name__ == "__main__":
    key = jax.random.PRNGKey(0)
    k1, k2, k3, k4 = jax.random.split(key, 4)

    # Deterministic "pre-tokenized" integer token ids (vocab size 32), as
    # TokenizerLayer would receive on its tensor fast-path.
    batch, padlen = 2, 16
    tokens = jax.random.randint(k1, (batch, padlen), minval=0, maxval=32,
                                dtype=jnp.int32)

    # 1) Default path: pure identity, no kernel launch.
    out = jax.block_until_ready(
        tokenizer_layer_forward(tokens, padlen=padlen, batch_first=True))
    assert out.shape == tokens.shape and out.dtype == tokens.dtype
    np.testing.assert_array_equal(np.asarray(out), np.asarray(tokens))

    # 2) Forced VMEM-copy path, small non-lane-dense shape (pad + single tile).
    small = jax.random.randint(k2, (batch, padlen), minval=0, maxval=32,
                               dtype=jnp.int32)
    out_small = jax.block_until_ready(
        tokenizer_layer_forward(small, padlen=padlen, force_vmem_copy=True))
    assert out_small.shape == small.shape and out_small.dtype == small.dtype
    np.testing.assert_array_equal(np.asarray(out_small), np.asarray(small))
    # No donation: the original input must still be valid after the copy.
    np.testing.assert_array_equal(np.asarray(small), np.asarray(small))

    # 3) Lane-dense aligned shape (no padding), int32.
    big = jax.random.randint(k3, (16, 128), minval=0, maxval=32,
                             dtype=jnp.int32)
    out_big = jax.block_until_ready(
        tokenizer_layer_forward(big, padlen=128, force_vmem_copy=True))
    np.testing.assert_array_equal(np.asarray(out_big), np.asarray(big))

    # 4) Exercise the multi-tile / partial-last-block path with a tiny forced
    #    tile budget (16 rows * 128 lanes * 4 B): (20, 128) int32 pads to 24
    #    rows -> grid of 2 with an uneven last block.
    odd = jax.random.randint(k4, (20, 128), minval=0, maxval=32,
                             dtype=jnp.int32)
    out_odd = jax.block_until_ready(
        _vmem_identity_copy(odd, target_tile_bytes=16 * 128 * 4))
    np.testing.assert_array_equal(np.asarray(out_odd), np.asarray(odd))

    # 5) 16-bit dtype: sublane alignment of 16 rows.
    bf = jax.random.normal(k4, (2, 8, 32), dtype=jnp.bfloat16)
    out_bf = jax.block_until_ready(
        tokenizer_layer_forward(bf, force_vmem_copy=True))
    assert out_bf.dtype == jnp.bfloat16 and out_bf.shape == bf.shape
    np.testing.assert_array_equal(np.asarray(out_bf), np.asarray(bf))

    print("KERNEL_OK")
</pallas_src>

<mosaic_0001>
module attributes {stable_mosaic.version = 11 : i64} {
  func.func @_identity_copy_kernel(%arg0: i32, %arg1: memref<8x128xi32, #tpu.memory_space<vmem>>, %arg2: memref<8x128xi32, #tpu.memory_space<vmem>>) attributes {dimension_semantics = [#tpu.dimension_semantics<parallel>], iteration_bounds = array<i64: 1>, scalar_prefetch = 0 : i64, scratch_operands = 0 : i64, tpu.core_type = #tpu.core_type<tc>, window_params = [{transform_indices = @transform_0, window_bounds = array<i64: 8, 128>}, {transform_indices = @transform_1, window_bounds = array<i64: 8, 128>}]} {
    %c0 = arith.constant 0 : index
    %c0_0 = arith.constant 0 : index
    %0 = vector.load %arg1[%c0, %c0_0] : memref<8x128xi32, #tpu.memory_space<vmem>>, vector<8x128xi32>
    %c0_1 = arith.constant 0 : index
    %c0_2 = arith.constant 0 : index
    %1 = vector.load %arg2[%c0_1, %c0_2] : memref<8x128xi32, #tpu.memory_space<vmem>>, vector<8x128xi32>
    tpu.vector_store %arg2[%c0_1, %c0_2], %0 {strides = array<i32>} : memref<8x128xi32, #tpu.memory_space<vmem>>, vector<8x128xi32>,
    return
  }
  func.func @transform_0(%arg0: i32) -> (i32, i32) {
    %c0_i32 = arith.constant 0 : i32
    %c0_i32_0 = arith.constant 0 : i32
    return %arg0, %c0_i32 : i32, i32
  }
  func.func @transform_1(%arg0: i32) -> (i32, i32) {
    %c0_i32 = arith.constant 0 : i32
    %c0_i32_0 = arith.constant 0 : i32
    return %arg0, %c0_i32 : i32, i32
  }
}

</mosaic_0001>

<llo_original>
// kernel: tpu_custom_call.1
$region0: #{tpu_custom_call.1}
  #allocation0 [shape = 'u32[]', space=smem, size = 0x4, offset = 0x4, fixed_abs, tag = 'smem constant byte address 0x4 - core index']
  #allocation1 [shape = 'u32[144,128]{1,0:T(1,128)}', space=vmem, size = 0x12000, scoped, tag = 'internal scratch']
  %s0 = inlined_call_operand.hbm [shape: s32[8,128], index: 0, kind: input, shape index: {}]
  %s1 = inlined_call_operand.hbm [shape: s32[8,128], index: 1, kind: output, shape index: {}]
  %s2 = sld [smem:[#allocation0]]
  $region18: #{tpu_custom_call.1} parent=0
    _
  %s4 = ssub.s32 1, %s2
  %s5 = scalar_select 0, %s4, %s2
  $region1: #{tpu_custom_call.1} parent=0
    #allocation2 [shape = 'u8[4096]{0}', space=vmem, size = 0x1000, scoped, tag = 'input window, operand 0, single buffered']
    #allocation3 [shape = 's32[1]{0}', space=sflag, size = 0x4, scoped, tag = 'scoped memory for tpu_custom_call.1']
    #allocation4 [shape = 's32[1]{0}', space=sflag, size = 0x4, scoped, tag = 'scoped memory for tpu_custom_call.1']
    #allocation5 [shape = 'u8[4096]{0}', space=vmem, size = 0x1000, scoped, tag = 'output window, operand 0, single buffered']
    %6 = vsyncpa [#allocation3], 0
    %7 = vsyncpa [#allocation4], 0
    // Predicated region
    $region2: #{tpu_custom_call.1} parent=1 // pred_check
      _
    $region3: #{tpu_custom_call.1} parent=1 // pred_check_branch
      %9 = sbr.rel (0) target = $region5
    $region4: #{tpu_custom_call.1} parent=1 // pred_region
      %s11 = ssub.s32 128, 128
      %12 = vsyncadd [#allocation3], %s11
      %s14 = sshll.u32 [#allocation2], 4
      %s15 = int_to_ptr.vmem [resolvable:$true] %s14
      %17 = dma.hbm_to_vmem [thread:$0]  %s0, 128, %s15, [#allocation3]
    $region5: #{tpu_custom_call.1} parent=1 // pred_fallthru
      _
    // Predicated region
    $region6: #{tpu_custom_call.1} parent=1 // pred_check
      _
    $region7: #{tpu_custom_call.1} parent=1 // pred_check_branch
      %19 = sbr.rel (0) target = $region9
    $region8: #{tpu_custom_call.1} parent=1 // pred_region
      %20 = dma.done [#allocation3], 128
    $region9: #{tpu_custom_call.1} parent=1 // pred_fallthru
      _
    %v21 = vld [vmem:[#allocation2] sm:$0xff]
    %22 = vst [vmem:[#allocation5] sm:$0xff] %v21
    // Predicated region
    $region10: #{tpu_custom_call.1} parent=1 // pred_check
      _
    $region11: #{tpu_custom_call.1} parent=1 // pred_check_branch
      %24 = sbr.rel (0) target = $region13
    $region12: #{tpu_custom_call.1} parent=1 // pred_region
      %s26 = ssub.s32 128, 128
      %27 = vsyncadd [#allocation4], %s26
      %s29 = sshll.u32 [#allocation5], 4
      %s30 = int_to_ptr.vmem [resolvable:$true] %s29
      %32 = dma.vmem_to_hbm [thread:$0]  %s30, 128, %s1, [#allocation4]
    $region13: #{tpu_custom_call.1} parent=1 // pred_fallthru
      _
    // Predicated region
    $region14: #{tpu_custom_call.1} parent=1 // pred_check
      _
    $region15: #{tpu_custom_call.1} parent=1 // pred_check_branch
      %34 = sbr.rel (0) target = $region17
    $region16: #{tpu_custom_call.1} parent=1 // pred_region
      %35 = dma.done [#allocation4], 128
    $region17: #{tpu_custom_call.1} parent=1 // pred_fallthru
      _
    %36 = vsyncpa [#allocation3], 1
    %37 = vsyncpa [#allocation4], 1

</llo_original>
